<compile_context>
chip_gen: v7x
topology: tpu7x:2x2x1
jax: 0.10.0
libtpu: 0.0.40
codegen_flags: <defaults>
</compile_context>

<pallas_src>
import math

import jax
import jax.numpy as jnp
from jax.experimental import pallas as pl
from jax.experimental.pallas import tpu as pltpu


def _round_up(x, m):
    return (x + m - 1) // m * m


def _time_embedding_kernel(t_ref, emb_ref, w1_ref, b1_ref, w2_ref, b2_ref, o_ref):
    tm = t_ref.shape[0]
    t_pad = emb_ref.shape[0]

    # Fused embedding gather: one-hot(t) @ table on the (otherwise idle) MXU.
    # Compare in int32 (v5e VPU has no bf16), then cast the exact 0/1 selector
    # to bf16 so the gather matmul is a native bf16 x bf16 MXU pass.
    t_col = t_ref[...]                                          # [tm, 1] int32
    pos = jax.lax.broadcasted_iota(jnp.int32, (tm, t_pad), 1)   # [tm, T_pad]
    onehot = (pos == t_col).astype(jnp.float32).astype(jnp.bfloat16)
    x = jnp.dot(onehot, emb_ref[...],
                preferred_element_type=jnp.float32)             # [tm, dm_pad] f32
    # Table entries are stored in bf16, so casting x back to bf16 is exact.
    x = x.astype(jnp.bfloat16)

    # Linear -> Swish -> Linear: bf16 MXU operands, f32 accumulation, f32 swish.
    h = jnp.dot(x, w1_ref[...], preferred_element_type=jnp.float32) + b1_ref[...]
    h = h * jax.nn.sigmoid(h)                                   # Swish (f32)
    out = jnp.dot(h.astype(jnp.bfloat16), w2_ref[...],
                  preferred_element_type=jnp.float32) + b2_ref[...]
    o_ref[...] = out.astype(o_ref.dtype)


def make_sinusoidal_table(T, d_model):
    """Matches the torch construction exactly (interleaved sin/cos)."""
    assert d_model % 2 == 0
    emb = jnp.arange(0, d_model, 2, dtype=jnp.float32) / d_model * math.log(10000.0)
    emb = jnp.exp(-emb)                                  # [d_model // 2]
    pos = jnp.arange(T, dtype=jnp.float32)               # [T]
    emb = pos[:, None] * emb[None, :]                    # [T, d_model // 2]
    emb = jnp.stack([jnp.sin(emb), jnp.cos(emb)], axis=-1)
    return emb.reshape(T, d_model)                       # [T, d_model]


def xavier_uniform(key, fan_in, fan_out):
    a = math.sqrt(6.0 / (fan_in + fan_out))
    return jax.random.uniform(key, (fan_in, fan_out), jnp.float32, minval=-a, maxval=a)


def init_time_embedding_params(key, T, d_model, dim):
    """Builds zero-padded, lane-dense (multiple-of-128) parameters.

    Weights / embedding table are stored in bf16 (MXU-native); biases in f32.
    Matches the torch module's initialize(): xavier_uniform_ weights, zero biases.
    """
    assert d_model % 2 == 0
    k1, k2 = jax.random.split(key)
    emb = make_sinusoidal_table(T, d_model)              # [T, d_model]
    w1 = xavier_uniform(k1, d_model, dim)                # [d_model, dim]  (= W1.T of torch)
    w2 = xavier_uniform(k2, dim, dim)                    # [dim, dim]

    T_pad = _round_up(T, 128)        # lane-dense K for the one-hot gather matmul
    dm_pad = _round_up(d_model, 128)
    d_pad = _round_up(dim, 128)

    emb_p = jnp.zeros((T_pad, dm_pad), jnp.bfloat16).at[:T, :d_model].set(
        emb.astype(jnp.bfloat16))
    w1_p = jnp.zeros((dm_pad, d_pad), jnp.bfloat16).at[:d_model, :dim].set(
        w1.astype(jnp.bfloat16))
    w2_p = jnp.zeros((d_pad, d_pad), jnp.bfloat16).at[:dim, :dim].set(
        w2.astype(jnp.bfloat16))
    b1_p = jnp.zeros((1, d_pad), jnp.float32)            # torch init: zeros
    b2_p = jnp.zeros((1, d_pad), jnp.float32)
    return dict(emb=emb_p, w1=w1_p, b1=b1_p, w2=w2_p, b2=b2_p,
                T=T, d_model=d_model, dim=dim)


def time_embedding_forward(params, t, *, block_b=1024):
    """t: int32 [B] of timesteps in [0, T). Returns [B, dim] float32."""
    B = int(t.shape[0])
    dim = params["dim"]
    T_pad, dm_pad = params["emb"].shape
    d_pad = params["w1"].shape[1]

    # Batch tile: as large as possible (few grid steps amortize the ~0.35 us
    # per-step overhead), but keep >= 2 steps whenever the padded batch allows
    # so the "parallel" axis can shard across v7x's two TensorCores.
    B8 = _round_up(B, 8)
    if B8 >= 16:
        tm = min(_round_up(block_b, 8), _round_up(-(-B8 // 2), 8))
    else:
        tm = B8
    B_pad = _round_up(B, tm)

    # Pad batch (pad rows use t=0; they are sliced away below).  t stays a
    # tiny lane-sparse (tm, 1) int32 VMEM block on purpose — do not widen it.
    t_col = jnp.zeros((B_pad, 1), jnp.int32).at[:B, 0].set(t.astype(jnp.int32))

    # Explicit VMEM budget (headroom, capped at v7x physical 64 MiB): resident
    # bf16 weights (single-buffered) + double-buffered t/out tiles + scratch.
    resident_bytes = (params["emb"].size + params["w1"].size + params["w2"].size) * 2 \
                     + (params["b1"].size + params["b2"].size) * 4
    tile_bytes = 2 * (tm * 4 + tm * d_pad * 4)
    scratch_bytes = tm * (T_pad * 2 + dm_pad * 4 + 2 * d_pad * 4)
    vmem_limit = int(min(max(2 * (resident_bytes + tile_bytes + scratch_bytes),
                             16 * 1024 * 1024),
                         64 * 1024 * 1024))

    resident = dict(pipeline_mode=pl.Buffered(1))   # constant index map => never re-fetched

    out = pl.pallas_call(
        _time_embedding_kernel,
        out_shape=jax.ShapeDtypeStruct((B_pad, d_pad), jnp.float32),
        grid_spec=pltpu.PrefetchScalarGridSpec(
            num_scalar_prefetch=0,
            grid=(B_pad // tm,),
            in_specs=[
                pl.BlockSpec((tm, 1), lambda i: (i, 0)),                       # t (streamed)
                pl.BlockSpec((T_pad, dm_pad), lambda i: (0, 0), **resident),   # emb table
                pl.BlockSpec((dm_pad, d_pad), lambda i: (0, 0), **resident),   # W1
                pl.BlockSpec((1, d_pad), lambda i: (0, 0), **resident),        # b1
                pl.BlockSpec((d_pad, d_pad), lambda i: (0, 0), **resident),    # W2
                pl.BlockSpec((1, d_pad), lambda i: (0, 0), **resident),        # b2
            ],
            out_specs=pl.BlockSpec((tm, d_pad), lambda i: (i, 0)),
        ),
        compiler_params=pltpu.CompilerParams(
            dimension_semantics=("parallel",),
            vmem_limit_bytes=vmem_limit),
    )(t_col, params["emb"], params["w1"], params["b1"], params["w2"], params["b2"])

    # Keep the output lane-dense / unsliced when possible (avoids an extra
    # HBM round trip via a separate XLA slice op).
    if d_pad == dim:
        return out if B_pad == B else out[:B]
    return out[:B, :dim]


def time_embedding_reference(params, t):
    """Pure-JAX reference mirroring the kernel's bf16-operand / f32-accum math."""
    T, d_model, dim = params["T"], params["d_model"], params["dim"]
    emb = params["emb"][:T, :d_model].astype(jnp.float32)
    w1 = params["w1"][:d_model, :dim].astype(jnp.float32)
    b1 = params["b1"][:, :dim]
    w2 = params["w2"][:dim, :dim].astype(jnp.float32)
    b2 = params["b2"][:, :dim]
    x = jnp.take(emb, t, axis=0)                  # bf16-exact values, f32 container
    h = x @ w1 + b1
    h = h * jax.nn.sigmoid(h)
    h = h.astype(jnp.bfloat16).astype(jnp.float32)  # kernel feeds h to the MXU in bf16
    return h @ w2 + b2


if __name__ == "__main__":
    T, d_model, dim = 16, 32, 64
    B = 8

    key = jax.random.PRNGKey(0)
    kp, kt = jax.random.split(key)
    params = init_time_embedding_params(kp, T, d_model, dim)

    t = jax.random.randint(kt, (B,), 0, T, dtype=jnp.int32)

    out = jax.block_until_ready(time_embedding_forward(params, t))
    ref = time_embedding_reference(params, t)

    assert out.shape == (B, dim), out.shape
    # bf16 MXU operands (f32 accumulation): allow small dtype-induced drift.
    assert jnp.allclose(out, ref, atol=1e-2, rtol=1e-2), "mismatch vs reference"

    print("KERNEL_OK")
</pallas_src>

<mosaic_0001>
module attributes {stable_mosaic.version = 11 : i64} {
  func.func @_time_embedding_kernel(%arg0: i32, %arg1: memref<8x1xi32, #tpu.memory_space<vmem>>, %arg2: memref<128x128xbf16, #tpu.memory_space<vmem>>, %arg3: memref<128x128xbf16, #tpu.memory_space<vmem>>, %arg4: memref<1x128xf32, #tpu.memory_space<vmem>>, %arg5: memref<128x128xbf16, #tpu.memory_space<vmem>>, %arg6: memref<1x128xf32, #tpu.memory_space<vmem>>, %arg7: memref<8x128xf32, #tpu.memory_space<vmem>>) attributes {dimension_semantics = [#tpu.dimension_semantics<parallel>], iteration_bounds = array<i64: 1>, scalar_prefetch = 0 : i64, scratch_operands = 0 : i64, tpu.core_type = #tpu.core_type<tc>, window_params = [{transform_indices = @transform_0, window_bounds = array<i64: 8, 1>}, {pipeline_mode = #tpu.pipeline_mode<synchronous>, transform_indices = @transform_1, window_bounds = array<i64: 128, 128>}, {pipeline_mode = #tpu.pipeline_mode<synchronous>, transform_indices = @transform_2, window_bounds = array<i64: 128, 128>}, {pipeline_mode = #tpu.pipeline_mode<synchronous>, transform_indices = @transform_3, window_bounds = array<i64: 1, 128>}, {pipeline_mode = #tpu.pipeline_mode<synchronous>, transform_indices = @transform_4, window_bounds = array<i64: 128, 128>}, {pipeline_mode = #tpu.pipeline_mode<synchronous>, transform_indices = @transform_5, window_bounds = array<i64: 1, 128>}, {transform_indices = @transform_6, window_bounds = array<i64: 8, 128>}]} {
    %c0 = arith.constant 0 : index
    %c0_0 = arith.constant 0 : index
    %0 = vector.load %arg1[%c0, %c0_0] : memref<8x1xi32, #tpu.memory_space<vmem>>, vector<8x1xi32>
    %1 = tpu.iota {dimensions = array<i32: 1>} : vector<8x128xi32>
    %2 = vector.broadcast %0 : vector<8x1xi32> to vector<8x128xi32>
    %3 = arith.cmpi eq, %1, %2 : vector<8x128xi32>
    %4 = arith.extui %3 : vector<8x128xi1> to vector<8x128xi32>
    %5 = arith.sitofp %4 : vector<8x128xi32> to vector<8x128xf32>
    %6 = arith.truncf %5 : vector<8x128xf32> to vector<8x128xbf16>
    %c0_1 = arith.constant 0 : index
    %c0_2 = arith.constant 0 : index
    %7 = vector.load %arg2[%c0_1, %c0_2] : memref<128x128xbf16, #tpu.memory_space<vmem>>, vector<128x128xbf16>
    %cst = arith.constant dense<0.000000e+00> : vector<8x128xf32>
    %8 = tpu.matmul %6, %7, %cst {dimension_numbers = #tpu.dot_dimension_numbers<[1], [0], [0], [1], [0, 0, 1, 1], [], []>} : vector<8x128xbf16>, vector<128x128xbf16>, vector<8x128xf32> -> vector<8x128xf32>
    %9 = arith.truncf %8 : vector<8x128xf32> to vector<8x128xbf16>
    %c0_3 = arith.constant 0 : index
    %c0_4 = arith.constant 0 : index
    %10 = vector.load %arg3[%c0_3, %c0_4] : memref<128x128xbf16, #tpu.memory_space<vmem>>, vector<128x128xbf16>
    %cst_5 = arith.constant dense<0.000000e+00> : vector<8x128xf32>
    %11 = tpu.matmul %9, %10, %cst_5 {dimension_numbers = #tpu.dot_dimension_numbers<[1], [0], [0], [1], [0, 0, 1, 1], [], []>} : vector<8x128xbf16>, vector<128x128xbf16>, vector<8x128xf32> -> vector<8x128xf32>
    %c0_6 = arith.constant 0 : index
    %c0_7 = arith.constant 0 : index
    %12 = vector.load %arg4[%c0_6, %c0_7] : memref<1x128xf32, #tpu.memory_space<vmem>>, vector<1x128xf32>
    %13 = vector.broadcast %12 : vector<1x128xf32> to vector<8x128xf32>
    %14 = arith.addf %11, %13 : vector<8x128xf32>
    %15 = arith.negf %14 : vector<8x128xf32>
    %16 = math.exp %15 : vector<8x128xf32>
    %cst_8 = arith.constant 1.000000e+00 : f32
    %17 = vector.broadcast %cst_8 : f32 to vector<8x128xf32>
    %18 = arith.addf %17, %16 : vector<8x128xf32>
    %19 = arith.divf %17, %18 : vector<8x128xf32>
    %20 = arith.mulf %14, %19 : vector<8x128xf32>
    %21 = arith.truncf %20 : vector<8x128xf32> to vector<8x128xbf16>
    %c0_9 = arith.constant 0 : index
    %c0_10 = arith.constant 0 : index
    %22 = vector.load %arg5[%c0_9, %c0_10] : memref<128x128xbf16, #tpu.memory_space<vmem>>, vector<128x128xbf16>
    %cst_11 = arith.constant dense<0.000000e+00> : vector<8x128xf32>
    %23 = tpu.matmul %21, %22, %cst_11 {dimension_numbers = #tpu.dot_dimension_numbers<[1], [0], [0], [1], [0, 0, 1, 1], [], []>} : vector<8x128xbf16>, vector<128x128xbf16>, vector<8x128xf32> -> vector<8x128xf32>
    %c0_12 = arith.constant 0 : index
    %c0_13 = arith.constant 0 : index
    %24 = vector.load %arg6[%c0_12, %c0_13] : memref<1x128xf32, #tpu.memory_space<vmem>>, vector<1x128xf32>
    %25 = vector.broadcast %24 : vector<1x128xf32> to vector<8x128xf32>
    %26 = arith.addf %23, %25 : vector<8x128xf32>
    %c0_14 = arith.constant 0 : index
    %c0_15 = arith.constant 0 : index
    %27 = vector.load %arg7[%c0_14, %c0_15] : memref<8x128xf32, #tpu.memory_space<vmem>>, vector<8x128xf32>
    tpu.vector_store %arg7[%c0_14, %c0_15], %26 {strides = array<i32>} : memref<8x128xf32, #tpu.memory_space<vmem>>, vector<8x128xf32>,
    return
  }
  func.func @transform_0(%arg0: i32) -> (i32, i32) {
    %c0_i32 = arith.constant 0 : i32
    %c0_i32_0 = arith.constant 0 : i32
    return %arg0, %c0_i32 : i32, i32
  }
  func.func @transform_1(%arg0: i32) -> (i32, i32) {
    %c0_i32 = arith.constant 0 : i32
    %c0_i32_0 = arith.constant 0 : i32
    %c0_i32_1 = arith.constant 0 : i32
    return %c0_i32, %c0_i32_0 : i32, i32
  }
  func.func @transform_2(%arg0: i32) -> (i32, i32) {
    %c0_i32 = arith.constant 0 : i32
    %c0_i32_0 = arith.constant 0 : i32
    %c0_i32_1 = arith.constant 0 : i32
    return %c0_i32, %c0_i32_0 : i32, i32
  }
  func.func @transform_3(%arg0: i32) -> (i32, i32) {
    %c0_i32 = arith.constant 0 : i32
    %c0_i32_0 = arith.constant 0 : i32
    %c0_i32_1 = arith.constant 0 : i32
    return %c0_i32, %c0_i32_0 : i32, i32
  }
  func.func @transform_4(%arg0: i32) -> (i32, i32) {
    %c0_i32 = arith.constant 0 : i32
    %c0_i32_0 = arith.constant 0 : i32
    %c0_i32_1 = arith.constant 0 : i32
    return %c0_i32, %c0_i32_0 : i32, i32
  }
  func.func @transform_5(%arg0: i32) -> (i32, i32) {
    %c0_i32 = arith.constant 0 : i32
    %c0_i32_0 = arith.constant 0 : i32
    %c0_i32_1 = arith.constant 0 : i32
    return %c0_i32, %c0_i32_0 : i32, i32
  }
  func.func @transform_6(%arg0: i32) -> (i32, i32) {
    %c0_i32 = arith.constant 0 : i32
    %c0_i32_0 = arith.constant 0 : i32
    return %arg0, %c0_i32 : i32, i32
  }
}

</mosaic_0001>

<llo_original>
// kernel: tpu_custom_call.1
$region0: #{tpu_custom_call.1}
  #allocation0 [shape = 'u32[]', space=smem, size = 0x4, offset = 0x4, fixed_abs, tag = 'smem constant byte address 0x4 - core index']
  #allocation1 [shape = 'u32[144,128]{1,0:T(1,128)}', space=vmem, size = 0x12000, scoped, tag = 'internal scratch']
  %s0 = inlined_call_operand.vmem [shape: s32[8,1], index: 0, kind: input, shape index: {}]
  %s1 = inlined_call_operand.hbm [shape: bf16[128,128], index: 1, kind: input, shape index: {}]
  %s2 = inlined_call_operand.hbm [shape: bf16[128,128], index: 2, kind: input, shape index: {}]
  %s3 = inlined_call_operand.vmem [shape: f32[1,128], index: 3, kind: input, shape index: {}]
  %s4 = inlined_call_operand.hbm [shape: bf16[128,128], index: 4, kind: input, shape index: {}]
  %s5 = inlined_call_operand.vmem [shape: f32[1,128], index: 5, kind: input, shape index: {}]
  %s6 = inlined_call_operand.hbm [shape: f32[8,128], index: 6, kind: output, shape index: {}]
  %s7 = sld [smem:[#allocation0]]
  $region46: #{tpu_custom_call.1} parent=0
    _
  %s9 = ssub.s32 1, %s7
  %s10 = scalar_select 0, %s9, %s7
  $region1: #{tpu_custom_call.1} parent=0
    #allocation2 [shape = 'u8[32768]{0}', space=vmem, size = 0x8000, scoped, tag = 'input window, operand 1, single buffered']
    #allocation3 [shape = 's32[1]{0}', space=sflag, size = 0x4, scoped, tag = 'scoped memory for tpu_custom_call.1']
    #allocation4 [shape = 's32[1]{0}', space=sflag, size = 0x4, scoped, tag = 'scoped memory for tpu_custom_call.1']
    #allocation5 [shape = 'u8[32768]{0}', space=vmem, size = 0x8000, scoped, tag = 'input window, operand 2, single buffered']
    #allocation6 [shape = 's32[1]{0}', space=sflag, size = 0x4, scoped, tag = 'scoped memory for tpu_custom_call.1']
    #allocation7 [shape = 'u8[32768]{0}', space=vmem, size = 0x8000, scoped, tag = 'input window, operand 4, single buffered']
    #allocation8 [shape = 'u8[4096]{0}', space=vmem, size = 0x1000, scoped, tag = 'output window, operand 0, single buffered']
    %11 = vsyncpa [#allocation3], 0
    %12 = vsyncpa [#allocation6], 0
    %13 = vsyncpa [#allocation4], 0
    // Predicated region
    $region2: #{tpu_custom_call.1} parent=1 // pred_check
      _
    $region3: #{tpu_custom_call.1} parent=1 // pred_check_branch
      %15 = sbr.rel (0) target = $region5
    $region4: #{tpu_custom_call.1} parent=1 // pred_region
      _
    $region5: #{tpu_custom_call.1} parent=1 // pred_fallthru
      _
    // Predicated region
    $region6: #{tpu_custom_call.1} parent=1 // pred_check
      _
    $region7: #{tpu_custom_call.1} parent=1 // pred_check_branch
      %17 = sbr.rel (0) target = $region9
    $region8: #{tpu_custom_call.1} parent=1 // pred_region
      %s19 = ssub.s32 1024, 1024
      %20 = vsyncadd [#allocation3], %s19
      %s21 = sshll.u32 [#allocation2], 4
      %s22 = int_to_ptr.vmem [resolvable:$true] %s21
      %27 = dma.hbm_to_vmem [thread:$0]  %s1, 1024, %s22, [#allocation3], 64, 64, 4
    $region9: #{tpu_custom_call.1} parent=1 // pred_fallthru
      _
    // Predicated region
    $region10: #{tpu_custom_call.1} parent=1 // pred_check
      _
    $region11: #{tpu_custom_call.1} parent=1 // pred_check_branch
      %29 = sbr.rel (0) target = $region13
    $region12: #{tpu_custom_call.1} parent=1 // pred_region
      %s31 = ssub.s32 1024, 1024
      %32 = vsyncadd [#allocation6], %s31
      %s33 = sshll.u32 [#allocation5], 4
      %s34 = int_to_ptr.vmem [resolvable:$true] %s33
      %39 = dma.hbm_to_vmem [thread:$0]  %s2, 1024, %s34, [#allocation6], 64, 64, 4
    $region13: #{tpu_custom_call.1} parent=1 // pred_fallthru
      _
    // Predicated region
    $region14: #{tpu_custom_call.1} parent=1 // pred_check
      _
    $region15: #{tpu_custom_call.1} parent=1 // pred_check_branch
      %41 = sbr.rel (0) target = $region17
    $region16: #{tpu_custom_call.1} parent=1 // pred_region
      _
    $region17: #{tpu_custom_call.1} parent=1 // pred_fallthru
      _
    // Predicated region
    $region18: #{tpu_custom_call.1} parent=1 // pred_check
      _
    $region19: #{tpu_custom_call.1} parent=1 // pred_check_branch
      %43 = sbr.rel (0) target = $region21
    $region20: #{tpu_custom_call.1} parent=1 // pred_region
      %s45 = ssub.s32 1024, 1024
      %46 = vsyncadd [#allocation6], %s45
      %s47 = sshll.u32 [#allocation7], 4
      %s48 = int_to_ptr.vmem [resolvable:$true] %s47
      %53 = dma.hbm_to_vmem [thread:$0]  %s4, 1024, %s48, [#allocation6], 64, 64, 4
    $region21: #{tpu_custom_call.1} parent=1 // pred_fallthru
      _
    // Predicated region
    $region22: #{tpu_custom_call.1} parent=1 // pred_check
      _
    $region23: #{tpu_custom_call.1} parent=1 // pred_check_branch
      %55 = sbr.rel (0) target = $region25
    $region24: #{tpu_custom_call.1} parent=1 // pred_region
      _
    $region25: #{tpu_custom_call.1} parent=1 // pred_fallthru
      _
    // Predicated region
    $region26: #{tpu_custom_call.1} parent=1 // pred_check
      _
    $region27: #{tpu_custom_call.1} parent=1 // pred_check_branch
      %57 = sbr.rel (0) target = $region29
    $region28: #{tpu_custom_call.1} parent=1 // pred_region
      %58 = dma.done [#allocation3], 1024
    $region29: #{tpu_custom_call.1} parent=1 // pred_fallthru
      _
    // Predicated region
    $region30: #{tpu_custom_call.1} parent=1 // pred_check
      _
    $region31: #{tpu_custom_call.1} parent=1 // pred_check_branch
      %60 = sbr.rel (0) target = $region33
    $region32: #{tpu_custom_call.1} parent=1 // pred_region
      %61 = dma.done [#allocation6], 1024
    $region33: #{tpu_custom_call.1} parent=1 // pred_fallthru
      _
    // Predicated region
    $region34: #{tpu_custom_call.1} parent=1 // pred_check
      _
    $region35: #{tpu_custom_call.1} parent=1 // pred_check_branch
      %63 = sbr.rel (0) target = $region37
    $region36: #{tpu_custom_call.1} parent=1 // pred_region
      %64 = dma.done [#allocation6], 1024
    $region37: #{tpu_custom_call.1} parent=1 // pred_fallthru
      _
    %v66 = vld [vmem:[%s0] sm:$0xff]
    %v67 = vlaneseq
    %v68 = vand.u32 %v67, 127
    %69 = vset.pattern.permute.xlu0 0
    %70 = vperm.xlu0 %69, %v66
    %v71 = vpop.permute.xlu0 %70
    %vm72 = vcmp.eq.s32.totalorder %v68, %v71
    %v73 = vsel %vm72, 1, 0
    %v74 = vcvt.s32.f32 %v73
    %v75 = vpack.c.bf16 %v74, %v74
    %v76 = vld [vmem:[#allocation2] sm:$0xf]
    %v77 = vld [vmem:[#allocation2 + $0x4] sm:$0xf]
    %v78 = vld [vmem:[#allocation2 + $0x8] sm:$0xf]
    %v79 = vld [vmem:[#allocation2 + $0xc] sm:$0xf]
    %v80 = vld [vmem:[#allocation2 + $0x10] sm:$0xf]
    %v81 = vld [vmem:[#allocation2 + $0x14] sm:$0xf]
    %v82 = vld [vmem:[#allocation2 + $0x18] sm:$0xf]
    %v83 = vld [vmem:[#allocation2 + $0x1c] sm:$0xf]
    %v84 = vld [vmem:[#allocation2 + $0x20] sm:$0xf]
    %v85 = vld [vmem:[#allocation2 + $0x24] sm:$0xf]
    %v86 = vld [vmem:[#allocation2 + $0x28] sm:$0xf]
    %v87 = vld [vmem:[#allocation2 + $0x2c] sm:$0xf]
    %v88 = vld [vmem:[#allocation2 + $0x30] sm:$0xf]
    %v89 = vld [vmem:[#allocation2 + $0x34] sm:$0xf]
    %v90 = vld [vmem:[#allocation2 + $0x38] sm:$0xf]
    %v91 = vld [vmem:[#allocation2 + $0x3c] sm:$0xf]
    %v108 = vunpack.c.l.b16 %v76
    %v109 = vunpack.c.l.b16 %v77
    %v110 = vunpack.c.l.b16 %v78
    %v111 = vunpack.c.l.b16 %v79
    %v112 = vunpack.c.l.b16 %v80
    %v113 = vunpack.c.l.b16 %v81
    %v114 = vunpack.c.l.b16 %v82
    %v115 = vunpack.c.l.b16 %v83
    %v116 = vunpack.c.l.b16 %v84
    %v117 = vunpack.c.l.b16 %v85
    %v118 = vunpack.c.l.b16 %v86
    %v119 = vunpack.c.l.b16 %v87
    %v120 = vunpack.c.l.b16 %v88
    %v121 = vunpack.c.l.b16 %v89
    %v122 = vunpack.c.l.b16 %v90
    %v123 = vunpack.c.l.b16 %v91
    %v124 = vpack.c.b16 %v109, %v108
    %v125 = vpack.c.b16 %v111, %v110
    %v126 = vpack.c.b16 %v113, %v112
    %v127 = vpack.c.b16 %v115, %v114
    %v128 = vpack.c.b16 %v117, %v116
    %v129 = vpack.c.b16 %v119, %v118
    %v130 = vpack.c.b16 %v121, %v120
    %v131 = vpack.c.b16 %v123, %v122
    %140 = vmatprep.subr.bf16.mxu0 0
    %141 = vmatpush1.bf16.msra.mxu0 %v124
    %142 = vmatprep.subr.bf16.mxu0 0
    %143 = vmatpush1.bf16.msra.mxu0 %v125
    %144 = vmatprep.subr.bf16.mxu0 0
    %145 = vmatpush1.bf16.msra.mxu0 %v126
    %146 = vmatprep.subr.bf16.mxu0 0
    %147 = vmatpush1.bf16.msra.mxu0 %v127
    %148 = vmatprep.subr.bf16.mxu0 0
    %149 = vmatpush1.bf16.msra.mxu0 %v128
    %150 = vmatprep.subr.bf16.mxu0 0
    %151 = vmatpush1.bf16.msra.mxu0 %v129
    %152 = vmatprep.subr.bf16.mxu0 0
    %153 = vmatpush1.bf16.msra.mxu0 %v130
    %154 = vmatprep.subr.bf16.mxu0 0
    %155 = vmatpush1.bf16.msra.mxu0 %v131
    %156 = vmatprep.subr.bf16.mxu0 0
    %157 = vmatpush1.bf16.msra.mxu0 0
    %158 = vmatprep.subr.bf16.mxu0 0
    %159 = vmatpush1.bf16.msra.mxu0 0
    %160 = vmatprep.subr.bf16.mxu0 0
    %161 = vmatpush1.bf16.msra.mxu0 0
    %162 = vmatprep.subr.bf16.mxu0 0
    %163 = vmatpush1.bf16.msra.mxu0 0
    %164 = vmatprep.subr.bf16.mxu0 0
    %165 = vmatpush1.bf16.msra.mxu0 0
    %166 = vmatprep.subr.bf16.mxu0 0
    %167 = vmatpush1.bf16.msra.mxu0 0
    %168 = vmatprep.subr.bf16.mxu0 0
    %169 = vmatpush1.bf16.msra.mxu0 0
    %170 = vmatprep.subr.bf16.mxu0 0
    %171 = vmatpush1.bf16.msra.mxu0 0
    %172 = vmatprep.mubr.bf16.mxu0 0
    %173 = vmatmul.mubr.bf16.gmra.mrb[0].mxu0 %v75
    %v174 = vpop.f32.mrb[0].mxu0
    %v175 = vadd.f32 0.0, %v174
    %v176 = vpop.f32.mrb[0].mxu0
    %v177 = vpop.f32.mrb[0].mxu0
    %v178 = vpop.f32.mrb[0].mxu0
    %179 = vdwg.mxu0
    %v180 = vpack.c.bf16 %v175, %v175
    %v181 = vld [vmem:[#allocation5] sm:$0xf]
    %v182 = vld [vmem:[#allocation5 + $0x4] sm:$0xf]
    %v183 = vld [vmem:[#allocation5 + $0x8] sm:$0xf]
    %v184 = vld [vmem:[#allocation5 + $0xc] sm:$0xf]
    %v185 = vld [vmem:[#allocation5 + $0x10] sm:$0xf]
    %v186 = vld [vmem:[#allocation5 + $0x14] sm:$0xf]
    %v187 = vld [vmem:[#allocation5 + $0x18] sm:$0xf]
    %v188 = vld [vmem:[#allocation5 + $0x1c] sm:$0xf]
    %v189 = vld [vmem:[#allocation5 + $0x20] sm:$0xf]
    %v190 = vld [vmem:[#allocation5 + $0x24] sm:$0xf]
    %v191 = vld [vmem:[#allocation5 + $0x28] sm:$0xf]
    %v192 = vld [vmem:[#allocation5 + $0x2c] sm:$0xf]
    %v193 = vld [vmem:[#allocation5 + $0x30] sm:$0xf]
    %v194 = vld [vmem:[#allocation5 + $0x34] sm:$0xf]
    %v195 = vld [vmem:[#allocation5 + $0x38] sm:$0xf]
    %v196 = vld [vmem:[#allocation5 + $0x3c] sm:$0xf]
    %v197 = vld [vmem:[%s3] sm:$0x1]
    %v199 = vlaneseq
    %v200 = vshrl.u32 %v199, 7
    %v201 = vsub.s32 0, %v200
    %v202 = vrot.slane %v197, %v201
    %v220 = vunpack.c.l.b16 %v181
    %v221 = vunpack.c.l.b16 %v182
    %v222 = vunpack.c.l.b16 %v183
    %v223 = vunpack.c.l.b16 %v184
    %v224 = vunpack.c.l.b16 %v185
    %v225 = vunpack.c.l.b16 %v186
    %v226 = vunpack.c.l.b16 %v187
    %v227 = vunpack.c.l.b16 %v188
    %v228 = vunpack.c.l.b16 %v189
    %v229 = vunpack.c.l.b16 %v190
    %v230 = vunpack.c.l.b16 %v191
    %v231 = vunpack.c.l.b16 %v192
    %v232 = vunpack.c.l.b16 %v193
    %v233 = vunpack.c.l.b16 %v194
    %v234 = vunpack.c.l.b16 %v195
    %v235 = vunpack.c.l.b16 %v196
    %v236 = vpack.c.b16 %v221, %v220
    %v237 = vpack.c.b16 %v223, %v222
    %v238 = vpack.c.b16 %v225, %v224
    %v239 = vpack.c.b16 %v227, %v226
    %v240 = vpack.c.b16 %v229, %v228
    %v241 = vpack.c.b16 %v231, %v230
    %v242 = vpack.c.b16 %v233, %v232
    %v243 = vpack.c.b16 %v235, %v234
    %252 = vmatprep.subr.bf16.mxu0 0
    %253 = vmatpush1.bf16.msra.mxu0 %v236
    %254 = vmatprep.subr.bf16.mxu0 0
    %255 = vmatpush1.bf16.msra.mxu0 %v237
    %256 = vmatprep.subr.bf16.mxu0 0
    %257 = vmatpush1.bf16.msra.mxu0 %v238
    %258 = vmatprep.subr.bf16.mxu0 0
    %259 = vmatpush1.bf16.msra.mxu0 %v239
    %260 = vmatprep.subr.bf16.mxu0 0
    %261 = vmatpush1.bf16.msra.mxu0 %v240
    %262 = vmatprep.subr.bf16.mxu0 0
    %263 = vmatpush1.bf16.msra.mxu0 %v241
    %264 = vmatprep.subr.bf16.mxu0 0
    %265 = vmatpush1.bf16.msra.mxu0 %v242
    %266 = vmatprep.subr.bf16.mxu0 0
    %267 = vmatpush1.bf16.msra.mxu0 %v243
    %268 = vmatprep.subr.bf16.mxu0 0
    %269 = vmatpush1.bf16.msra.mxu0 0
    %270 = vmatprep.subr.bf16.mxu0 0
    %271 = vmatpush1.bf16.msra.mxu0 0
    %272 = vmatprep.subr.bf16.mxu0 0
    %273 = vmatpush1.bf16.msra.mxu0 0
    %274 = vmatprep.subr.bf16.mxu0 0
    %275 = vmatpush1.bf16.msra.mxu0 0
    %276 = vmatprep.subr.bf16.mxu0 0
    %277 = vmatpush1.bf16.msra.mxu0 0
    %278 = vmatprep.subr.bf16.mxu0 0
    %279 = vmatpush1.bf16.msra.mxu0 0
    %280 = vmatprep.subr.bf16.mxu0 0
    %281 = vmatpush1.bf16.msra.mxu0 0
    %282 = vmatprep.subr.bf16.mxu0 0
    %283 = vmatpush1.bf16.msra.mxu0 0
    %284 = vmatprep.mubr.bf16.mxu0 0
    %285 = vmatmul.mubr.bf16.gmra.mrb[0].mxu0 %v180
    %v286 = vpop.f32.mrb[0].mxu0
    %v287 = vadd.f32 %v202, %v286
    %v288 = vpop.f32.mrb[0].mxu0
    %v289 = vpop.f32.mrb[0].mxu0
    %v290 = vpop.f32.mrb[0].mxu0
    %291 = vdwg.mxu0
    %v292 = vxor.u32 %v287, 2147483648
    %v293 = vmul.f32 %v292, 1.442695
    %v294 = vpow.pop %v293
    %v295 = vadd.f32 %v294, 1.0
    %v296 = vrcp.pop %v295
    %v297 = vmul.f32 1.0, %v296
    %v298 = vmul.f32 %v287, %v297
    %v299 = vpack.c.bf16 %v298, %v298
    %v300 = vld [vmem:[#allocation7] sm:$0xf]
    %v301 = vld [vmem:[#allocation7 + $0x4] sm:$0xf]
    %v302 = vld [vmem:[#allocation7 + $0x8] sm:$0xf]
    %v303 = vld [vmem:[#allocation7 + $0xc] sm:$0xf]
    %v304 = vld [vmem:[#allocation7 + $0x10] sm:$0xf]
    %v305 = vld [vmem:[#allocation7 + $0x14] sm:$0xf]
    %v306 = vld [vmem:[#allocation7 + $0x18] sm:$0xf]
    %v307 = vld [vmem:[#allocation7 + $0x1c] sm:$0xf]
    %v308 = vld [vmem:[#allocation7 + $0x20] sm:$0xf]
    %v309 = vld [vmem:[#allocation7 + $0x24] sm:$0xf]
    %v310 = vld [vmem:[#allocation7 + $0x28] sm:$0xf]
    %v311 = vld [vmem:[#allocation7 + $0x2c] sm:$0xf]
    %v312 = vld [vmem:[#allocation7 + $0x30] sm:$0xf]
    %v313 = vld [vmem:[#allocation7 + $0x34] sm:$0xf]
    %v314 = vld [vmem:[#allocation7 + $0x38] sm:$0xf]
    %v315 = vld [vmem:[#allocation7 + $0x3c] sm:$0xf]
    %v316 = vld [vmem:[%s5] sm:$0x1]
    %v318 = vlaneseq
    %v319 = vshrl.u32 %v318, 7
    %v320 = vsub.s32 0, %v319
    %v321 = vrot.slane %v316, %v320
    %v339 = vunpack.c.l.b16 %v300
    %v340 = vunpack.c.l.b16 %v301
    %v341 = vunpack.c.l.b16 %v302
    %v342 = vunpack.c.l.b16 %v303
    %v343 = vunpack.c.l.b16 %v304
    %v344 = vunpack.c.l.b16 %v305
    %v345 = vunpack.c.l.b16 %v306
    %v346 = vunpack.c.l.b16 %v307
    %v347 = vunpack.c.l.b16 %v308
    %v348 = vunpack.c.l.b16 %v309
    %v349 = vunpack.c.l.b16 %v310
    %v350 = vunpack.c.l.b16 %v311
    %v351 = vunpack.c.l.b16 %v312
    %v352 = vunpack.c.l.b16 %v313
    %v353 = vunpack.c.l.b16 %v314
    %v354 = vunpack.c.l.b16 %v315
    %v355 = vpack.c.b16 %v340, %v339
    %v356 = vpack.c.b16 %v342, %v341
    %v357 = vpack.c.b16 %v344, %v343
    %v358 = vpack.c.b16 %v346, %v345
    %v359 = vpack.c.b16 %v348, %v347
    %v360 = vpack.c.b16 %v350, %v349
    %v361 = vpack.c.b16 %v352, %v351
    %v362 = vpack.c.b16 %v354, %v353
    %371 = vmatprep.subr.bf16.mxu0 0
    %372 = vmatpush1.bf16.msra.mxu0 %v355
    %373 = vmatprep.subr.bf16.mxu0 0
    %374 = vmatpush1.bf16.msra.mxu0 %v356
    %375 = vmatprep.subr.bf16.mxu0 0
    %376 = vmatpush1.bf16.msra.mxu0 %v357
    %377 = vmatprep.subr.bf16.mxu0 0
    %378 = vmatpush1.bf16.msra.mxu0 %v358
    %379 = vmatprep.subr.bf16.mxu0 0
    %380 = vmatpush1.bf16.msra.mxu0 %v359
    %381 = vmatprep.subr.bf16.mxu0 0
    %382 = vmatpush1.bf16.msra.mxu0 %v360
    %383 = vmatprep.subr.bf16.mxu0 0
    %384 = vmatpush1.bf16.msra.mxu0 %v361
    %385 = vmatprep.subr.bf16.mxu0 0
    %386 = vmatpush1.bf16.msra.mxu0 %v362
    %387 = vmatprep.subr.bf16.mxu0 0
    %388 = vmatpush1.bf16.msra.mxu0 0
    %389 = vmatprep.subr.bf16.mxu0 0
    %390 = vmatpush1.bf16.msra.mxu0 0
    %391 = vmatprep.subr.bf16.mxu0 0
    %392 = vmatpush1.bf16.msra.mxu0 0
    %393 = vmatprep.subr.bf16.mxu0 0
    %394 = vmatpush1.bf16.msra.mxu0 0
    %395 = vmatprep.subr.bf16.mxu0 0
    %396 = vmatpush1.bf16.msra.mxu0 0
    %397 = vmatprep.subr.bf16.mxu0 0
    %398 = vmatpush1.bf16.msra.mxu0 0
    %399 = vmatprep.subr.bf16.mxu0 0
    %400 = vmatpush1.bf16.msra.mxu0 0
    %401 = vmatprep.subr.bf16.mxu0 0
    %402 = vmatpush1.bf16.msra.mxu0 0
    %403 = vmatprep.mubr.bf16.mxu0 0
    %404 = vmatmul.mubr.bf16.gmra.mrb[0].mxu0 %v299
    %v405 = vpop.f32.mrb[0].mxu0
    %v406 = vadd.f32 %v321, %v405
    %v407 = vpop.f32.mrb[0].mxu0
    %v408 = vpop.f32.mrb[0].mxu0
    %v409 = vpop.f32.mrb[0].mxu0
    %410 = vdwg.mxu0
    %411 = vst [vmem:[#allocation8] sm:$0xff] %v406
    // Predicated region
    $region38: #{tpu_custom_call.1} parent=1 // pred_check
      _
    $region39: #{tpu_custom_call.1} parent=1 // pred_check_branch
      %413 = sbr.rel (0) target = $region41
    $region40: #{tpu_custom_call.1} parent=1 // pred_region
      %s415 = ssub.s32 128, 128
      %416 = vsyncadd [#allocation4], %s415
      %s418 = sshll.u32 [#allocation8], 4
      %s419 = int_to_ptr.vmem [resolvable:$true] %s418
      %421 = dma.vmem_to_hbm [thread:$0]  %s419, 128, %s6, [#allocation4]
    $region41: #{tpu_custom_call.1} parent=1 // pred_fallthru
      _
    // Predicated region
    $region42: #{tpu_custom_call.1} parent=1 // pred_check
      _
    $region43: #{tpu_custom_call.1} parent=1 // pred_check_branch
      %423 = sbr.rel (0) target = $region45
    $region44: #{tpu_custom_call.1} parent=1 // pred_region
      %424 = dma.done [#allocation4], 128
    $region45: #{tpu_custom_call.1} parent=1 // pred_fallthru
      _
    %425 = vsyncpa [#allocation3], 1
    %426 = vsyncpa [#allocation6], 1
    %427 = vsyncpa [#allocation4], 1

</llo_original>
